<compile_context>
chip_gen: v7x
topology: tpu7x:2x2x1
jax: 0.10.0
libtpu: 0.0.40
codegen_flags: <defaults>
</compile_context>

<pallas_src>
import functools

import jax
import jax.numpy as jnp
from jax import lax
from jax.experimental import pallas as pl
from jax.experimental.pallas import tpu as pltpu

_LANE = 128
_MAX_STATIC_CHUNKS = 32          # fully unroll the chunked reduction up to here


def _make_divisible(v, divisor, min_value=None):
    if min_value is None:
        min_value = divisor
    new_v = max(min_value, int(v + divisor / 2) // divisor * divisor)
    if new_v < 0.9 * v:
        new_v += divisor
    return new_v


def _round_up(v, m):
    return (v + m - 1) // m * m


# ---------------------------------------------------------------------------
# Kernel: one batch tile (TB, C, HW) in / out; FC params resident in VMEM.
# ---------------------------------------------------------------------------
def se_kernel(x_ref, w1t_ref, b1_ref, w2t_ref, b2_ref, o_ref, *, inv_hw, hw):
    full = hw // _LANE            # number of complete 128-lane chunks
    rem = hw - full * _LANE       # ragged tail (no wrapper-side padding)

    # ---- stage 1: spatial sum, staged on the VPU, f32 accumulation --------
    if full > 0:
        acc = x_ref[:, :, 0:_LANE].astype(jnp.float32)
        if full > 1:
            if full <= _MAX_STATIC_CHUNKS:
                # Static unroll keeps the vld/vadd interleave visible to the
                # LLO scheduler (covers up to 56x56 feature maps).
                for k in range(1, full):
                    acc = acc + x_ref[:, :, k * _LANE:(k + 1) * _LANE].astype(jnp.float32)
            else:
                def body(k, a):
                    off = pl.multiple_of(k * _LANE, _LANE)
                    return a + x_ref[:, :, pl.ds(off, _LANE)].astype(jnp.float32)
                acc = lax.fori_loop(1, full, body, acc, unroll=8)
        ssum = jnp.sum(acc, axis=-1)                            # (TB, C) f32
        if rem > 0:
            # Ragged tail chunk: the ref logically ends at hw, so this slice
            # covers exactly the valid lanes (masked reduce, no garbage).
            ssum = ssum + jnp.sum(
                x_ref[:, :, full * _LANE:hw].astype(jnp.float32), axis=-1)
    else:
        # HW < 128 (e.g. 7x7): single masked lane reduce over the whole ref.
        ssum = jnp.sum(x_ref[...].astype(jnp.float32), axis=-1)
    y = ssum * inv_hw                                           # (TB, C) f32

    # ---- tiny FC1 -> ReLU -> FC2 -> sigmoid (f32 accumulation) ------------
    w1 = w1t_ref[...]
    yy = y if w1.dtype == jnp.float32 else y.astype(w1.dtype)   # native MXU dtype
    h = jnp.dot(yy, w1, preferred_element_type=jnp.float32) + b1_ref[...].astype(jnp.float32)
    h = jnp.maximum(h, 0.0)                                     # (TB, hidden)

    w2 = w2t_ref[...]
    hh = h if w2.dtype == jnp.float32 else h.astype(w2.dtype)
    s = jnp.dot(hh, w2, preferred_element_type=jnp.float32) + b2_ref[...].astype(jnp.float32)
    s = jax.nn.sigmoid(s)                                       # (TB, C) f32

    # ---- broadcast scale in the I/O dtype (no full-tile up/down casts) ----
    scale = s.astype(x_ref.dtype)
    o_ref[...] = (x_ref[...] * scale[:, :, None]).astype(o_ref.dtype)


# ---------------------------------------------------------------------------
# VMEM sizing / batch-tile picking
# ---------------------------------------------------------------------------
def _vmem_caps():
    """(pipelined-footprint budget, vmem_limit_bytes), sized from chip VMEM."""
    cap = 64 * 1024 * 1024                    # conservative fallback: v7x per-TC
    try:
        info = pltpu.get_tpu_info()
        for attr in ("vmem_capacity_bytes", "vmem_size_bytes", "vmem_bytes"):
            v = getattr(info, attr, None)
            if v:
                cap = int(v)
                break
    except Exception:
        pass
    cap = max(cap, 32 * 1024 * 1024)
    budget = max(12 * 1024 * 1024, min(48 * 1024 * 1024, int(cap * 0.55)))
    limit = min(int(cap * 0.75), budget + 16 * 1024 * 1024)
    limit = max(limit, budget + 4 * 1024 * 1024)
    return budget, limit


def _pick_batch_tile(B, C, HW, itemsize, hidden, requested=None):
    """Largest batch tile whose full VMEM footprint (double-buffered I/O
    blocks + f32 accumulator + scale intermediate + resident params) fits."""
    budget, vmem_limit = _vmem_caps()
    sub = 8 * max(1, 4 // itemsize)           # sublane packing: 8 (f32) / 16 (bf16)
    c_pad = _round_up(C, sub)
    hw_pad = _round_up(HW, _LANE)

    hid_lanes = _round_up(hidden, _LANE)
    c_lanes = _round_up(C, _LANE)
    params = 2 * 4 * (c_pad * hid_lanes + _round_up(hidden, 8) * c_lanes
                      + 8 * hid_lanes + 8 * c_lanes)

    def footprint(tb):
        blk = tb * c_pad * hw_pad
        io = 2 * 2 * blk * itemsize           # double-buffered in + out blocks
        acc = 2 * tb * c_pad * _LANE * 4      # staged f32 accumulator (+slack)
        inter = blk * itemsize                # full-tile scale intermediate
        return io + acc + inter + params

    cap = int(requested) if requested is not None else 64
    cap = max(1, min(cap, B))
    tb = 1
    for t in range(cap, 0, -1):
        if footprint(t) <= budget:
            tb = t
            break
    if requested is None and B > 1 and tb >= B:
        tb = (B + 1) // 2                     # keep >=2 grid steps (v7x megacore)
    return tb, vmem_limit


# ---------------------------------------------------------------------------
# Wrapper
# ---------------------------------------------------------------------------
def se_layer(x_nchw, w1, b1, w2, b2, *, tb=None, interpret=False):
    """x_nchw: (B, C, H, W); w1: (hidden, C); b1: (hidden,); w2: (C, hidden); b2: (C,)."""
    B, C, H, W = x_nchw.shape
    HW = H * W
    dtype = x_nchw.dtype

    # Free row-major reshape: no HBM copy, no padding, no post-slice.
    x3 = x_nchw.reshape(B, C, HW)

    # Pre-transpose weights so the kernel does row-major matmuls; 2-D biases.
    w1t = jnp.asarray(w1).T            # (C, hidden)
    w2t = jnp.asarray(w2).T            # (hidden, C)
    b1_2d = jnp.asarray(b1)[None, :]   # (1, hidden)
    b2_2d = jnp.asarray(b2)[None, :]   # (1, C)
    hidden = w1t.shape[1]

    itemsize = jnp.dtype(dtype).itemsize
    TB, vmem_limit = _pick_batch_tile(B, C, HW, itemsize, hidden, requested=tb)
    grid = (pl.cdiv(B, TB),)           # TB need not divide B (tail block masked)

    kernel = functools.partial(se_kernel, inv_hw=1.0 / HW, hw=HW)

    cost = pl.CostEstimate(
        flops=int(2 * B * C * HW + 4 * B * C * hidden),
        transcendentals=int(B * C),
        bytes_accessed=int(2 * B * C * HW * itemsize),
    )

    out = pl.pallas_call(
        kernel,
        out_shape=jax.ShapeDtypeStruct((B, C, HW), dtype),
        grid=grid,
        in_specs=[
            # Last two block dims equal the full array dims -> legal for any
            # (C, HW); stores are lane-dense whenever HW % 128 == 0.
            pl.BlockSpec((TB, C, HW), lambda i: (i, 0, 0)),
            # Parameters: constant index_map -> fetched once, stay resident.
            pl.BlockSpec((C, hidden), lambda i: (0, 0)),
            pl.BlockSpec((1, hidden), lambda i: (0, 0)),
            pl.BlockSpec((hidden, C), lambda i: (0, 0)),
            pl.BlockSpec((1, C), lambda i: (0, 0)),
        ],
        out_specs=pl.BlockSpec((TB, C, HW), lambda i: (i, 0, 0)),
        compiler_params=pltpu.CompilerParams(
            dimension_semantics=("parallel",),
            vmem_limit_bytes=int(vmem_limit),
        ),
        cost_estimate=cost,
        interpret=interpret,
    )(x3, w1t, b1_2d, w2t, b2_2d)

    return out.reshape(B, C, H, W)


def se_layer_ref(x_nchw, w1, b1, w2, b2):
    """Pure-JAX reference mirroring the PyTorch forward (f32 math)."""
    xf = x_nchw.astype(jnp.float32)
    y = jnp.mean(xf, axis=(2, 3))                               # (B, C)
    y = jnp.maximum(y @ jnp.asarray(w1, jnp.float32).T + jnp.asarray(b1, jnp.float32), 0.0)
    y = jax.nn.sigmoid(y @ jnp.asarray(w2, jnp.float32).T + jnp.asarray(b2, jnp.float32))
    return (xf * y[:, :, None, None]).astype(x_nchw.dtype)


if __name__ == "__main__":
    # Module config: SELayer(inp=4, oup=4, reduction=4)
    inp = 4
    oup = 4
    reduction = 4
    hidden = _make_divisible(inp // reduction, 8)               # -> 8

    B, C = 4, oup
    key = jax.random.PRNGKey(0)
    kx, kw1, kb1, kw2, kb2 = jax.random.split(key, 5)

    w1 = jax.random.normal(kw1, (hidden, oup), dtype=jnp.float32) * 0.1   # fc1 weight
    b1 = jax.random.normal(kb1, (hidden,), dtype=jnp.float32) * 0.1       # fc1 bias
    w2 = jax.random.normal(kw2, (oup, hidden), dtype=jnp.float32) * 0.1   # fc2 weight
    b2 = jax.random.normal(kb2, (oup,), dtype=jnp.float32) * 0.1          # fc2 bias

    # 1) f32, 16x16 (HW=256, lane-aligned): exact check, 2 grid steps.
    x = jax.random.normal(kx, (B, C, 16, 16), dtype=jnp.float32)
    out = jax.block_until_ready(se_layer(x, w1, b1, w2, b2, tb=2))
    ref = se_layer_ref(x, w1, b1, w2, b2)
    assert out.shape == x.shape
    assert jnp.allclose(out, ref, atol=1e-5, rtol=1e-5), "f32 16x16 mismatch"

    # 2) f32, 14x14 (HW=196): ragged tail chunk + masked stores, no pad/slice.
    x14 = jax.random.normal(kx, (B, C, 14, 14), dtype=jnp.float32)
    out14 = jax.block_until_ready(se_layer(x14, w1, b1, w2, b2))
    ref14 = se_layer_ref(x14, w1, b1, w2, b2)
    assert jnp.allclose(out14, ref14, atol=1e-5, rtol=1e-5), "f32 14x14 mismatch"

    # 3) f32, 7x7 (HW=49 < 128): single masked-lane reduce path.
    x7 = jax.random.normal(kx, (B, C, 7, 7), dtype=jnp.float32)
    out7 = jax.block_until_ready(se_layer(x7, w1, b1, w2, b2))
    ref7 = se_layer_ref(x7, w1, b1, w2, b2)
    assert jnp.allclose(out7, ref7, atol=1e-5, rtol=1e-5), "f32 7x7 mismatch"

    # 4) bf16 I/O, 16x16: halves HBM traffic; mean/FC stay f32, scale in bf16.
    x_bf16 = x.astype(jnp.bfloat16)
    out_bf = jax.block_until_ready(se_layer(x_bf16, w1, b1, w2, b2, tb=2))
    ref_bf = se_layer_ref(x_bf16, w1, b1, w2, b2)
    assert out_bf.dtype == jnp.bfloat16
    assert jnp.allclose(out_bf.astype(jnp.float32), ref_bf.astype(jnp.float32),
                        atol=5e-2, rtol=5e-2), "bf16 mismatch"

    print("KERNEL_OK")
</pallas_src>

<mosaic_0001>
module attributes {stable_mosaic.version = 11 : i64} {
  func.func @se_kernel(%arg0: i32, %arg1: memref<2x4x256xf32, #tpu.memory_space<vmem>>, %arg2: memref<4x8xf32, #tpu.memory_space<vmem>>, %arg3: memref<1x8xf32, #tpu.memory_space<vmem>>, %arg4: memref<8x4xf32, #tpu.memory_space<vmem>>, %arg5: memref<1x4xf32, #tpu.memory_space<vmem>>, %arg6: memref<2x4x256xf32, #tpu.memory_space<vmem>>) attributes {dimension_semantics = [#tpu.dimension_semantics<parallel>], iteration_bounds = array<i64: 2>, scalar_prefetch = 0 : i64, scratch_operands = 0 : i64, tpu.core_type = #tpu.core_type<tc>, window_params = [{transform_indices = @transform_0, window_bounds = array<i64: 2, 4, 256>}, {pipeline_mode = #tpu.pipeline_mode<synchronous>, transform_indices = @transform_1, window_bounds = array<i64: 4, 8>}, {pipeline_mode = #tpu.pipeline_mode<synchronous>, transform_indices = @transform_2, window_bounds = array<i64: 1, 8>}, {pipeline_mode = #tpu.pipeline_mode<synchronous>, transform_indices = @transform_3, window_bounds = array<i64: 8, 4>}, {pipeline_mode = #tpu.pipeline_mode<synchronous>, transform_indices = @transform_4, window_bounds = array<i64: 1, 4>}, {transform_indices = @transform_5, window_bounds = array<i64: 2, 4, 256>}]} {
    %c0 = arith.constant 0 : index
    %c0_0 = arith.constant 0 : index
    %c0_1 = arith.constant 0 : index
    %0 = vector.load %arg1[%c0, %c0_0, %c0_1] : memref<2x4x256xf32, #tpu.memory_space<vmem>>, vector<2x4x128xf32>
    %c0_2 = arith.constant 0 : index
    %c0_3 = arith.constant 0 : index
    %c128 = arith.constant 128 : index
    %1 = vector.load %arg1[%c0_2, %c0_3, %c128] : memref<2x4x256xf32, #tpu.memory_space<vmem>>, vector<2x4x128xf32>
    %2 = arith.addf %0, %1 : vector<2x4x128xf32>
    %cst = arith.constant dense<0.000000e+00> : vector<2x4xf32>
    %3 = vector.multi_reduction <add>, %2, %cst [2] : vector<2x4x128xf32> to vector<2x4xf32>
    %cst_4 = arith.constant 3.906250e-03 : f32
    %4 = vector.broadcast %cst_4 : f32 to vector<2x4xf32>
    %5 = arith.mulf %3, %4 : vector<2x4xf32>
    %c0_5 = arith.constant 0 : index
    %c0_6 = arith.constant 0 : index
    %6 = vector.load %arg2[%c0_5, %c0_6] : memref<4x8xf32, #tpu.memory_space<vmem>>, vector<4x8xf32>
    %cst_7 = arith.constant dense<0.000000e+00> : vector<2x8xf32>
    %7 = tpu.matmul %5, %6, %cst_7 {dimension_numbers = #tpu.dot_dimension_numbers<[1], [0], [0], [1], [0, 0, 1, 1], [], []>} : vector<2x4xf32>, vector<4x8xf32>, vector<2x8xf32> -> vector<2x8xf32>
    %c0_8 = arith.constant 0 : index
    %c0_9 = arith.constant 0 : index
    %8 = vector.load %arg3[%c0_8, %c0_9] : memref<1x8xf32, #tpu.memory_space<vmem>>, vector<1x8xf32>
    %9 = vector.broadcast %8 : vector<1x8xf32> to vector<2x8xf32>
    %10 = arith.addf %7, %9 : vector<2x8xf32>
    %cst_10 = arith.constant 0.000000e+00 : f32
    %11 = vector.broadcast %cst_10 : f32 to vector<2x8xf32>
    %12 = arith.maximumf %10, %11 : vector<2x8xf32>
    %c0_11 = arith.constant 0 : index
    %c0_12 = arith.constant 0 : index
    %13 = vector.load %arg4[%c0_11, %c0_12] : memref<8x4xf32, #tpu.memory_space<vmem>>, vector<8x4xf32>
    %cst_13 = arith.constant dense<0.000000e+00> : vector<2x4xf32>
    %14 = tpu.matmul %12, %13, %cst_13 {dimension_numbers = #tpu.dot_dimension_numbers<[1], [0], [0], [1], [0, 0, 1, 1], [], []>} : vector<2x8xf32>, vector<8x4xf32>, vector<2x4xf32> -> vector<2x4xf32>
    %c0_14 = arith.constant 0 : index
    %c0_15 = arith.constant 0 : index
    %15 = vector.load %arg5[%c0_14, %c0_15] : memref<1x4xf32, #tpu.memory_space<vmem>>, vector<1x4xf32>
    %16 = vector.broadcast %15 : vector<1x4xf32> to vector<2x4xf32>
    %17 = arith.addf %14, %16 : vector<2x4xf32>
    %18 = arith.negf %17 : vector<2x4xf32>
    %19 = math.exp %18 : vector<2x4xf32>
    %cst_16 = arith.constant 1.000000e+00 : f32
    %20 = vector.broadcast %cst_16 : f32 to vector<2x4xf32>
    %21 = arith.addf %20, %19 : vector<2x4xf32>
    %22 = arith.divf %20, %21 : vector<2x4xf32>
    %c0_17 = arith.constant 0 : index
    %c0_18 = arith.constant 0 : index
    %c0_19 = arith.constant 0 : index
    %23 = vector.load %arg1[%c0_17, %c0_18, %c0_19] : memref<2x4x256xf32, #tpu.memory_space<vmem>>, vector<2x4x256xf32>
    %24 = vector.shape_cast %22 : vector<2x4xf32> to vector<2x4x1xf32>
    %25 = vector.broadcast %24 : vector<2x4x1xf32> to vector<2x4x256xf32>
    %26 = arith.mulf %23, %25 : vector<2x4x256xf32>
    %c0_20 = arith.constant 0 : index
    %c0_21 = arith.constant 0 : index
    %c0_22 = arith.constant 0 : index
    %27 = vector.load %arg6[%c0_20, %c0_21, %c0_22] : memref<2x4x256xf32, #tpu.memory_space<vmem>>, vector<2x4x256xf32>
    tpu.vector_store %arg6[%c0_20, %c0_21, %c0_22], %26 {strides = array<i32>} : memref<2x4x256xf32, #tpu.memory_space<vmem>>, vector<2x4x256xf32>,
    return
  }
  func.func @transform_0(%arg0: i32) -> (i32, i32, i32) {
    %c0_i32 = arith.constant 0 : i32
    %c0_i32_0 = arith.constant 0 : i32
    %c0_i32_1 = arith.constant 0 : i32
    return %arg0, %c0_i32, %c0_i32_0 : i32, i32, i32
  }
  func.func @transform_1(%arg0: i32) -> (i32, i32) {
    %c0_i32 = arith.constant 0 : i32
    %c0_i32_0 = arith.constant 0 : i32
    %c0_i32_1 = arith.constant 0 : i32
    return %c0_i32, %c0_i32_0 : i32, i32
  }
  func.func @transform_2(%arg0: i32) -> (i32, i32) {
    %c0_i32 = arith.constant 0 : i32
    %c0_i32_0 = arith.constant 0 : i32
    %c0_i32_1 = arith.constant 0 : i32
    return %c0_i32, %c0_i32_0 : i32, i32
  }
  func.func @transform_3(%arg0: i32) -> (i32, i32) {
    %c0_i32 = arith.constant 0 : i32
    %c0_i32_0 = arith.constant 0 : i32
    %c0_i32_1 = arith.constant 0 : i32
    return %c0_i32, %c0_i32_0 : i32, i32
  }
  func.func @transform_4(%arg0: i32) -> (i32, i32) {
    %c0_i32 = arith.constant 0 : i32
    %c0_i32_0 = arith.constant 0 : i32
    %c0_i32_1 = arith.constant 0 : i32
    return %c0_i32, %c0_i32_0 : i32, i32
  }
  func.func @transform_5(%arg0: i32) -> (i32, i32, i32) {
    %c0_i32 = arith.constant 0 : i32
    %c0_i32_0 = arith.constant 0 : i32
    %c0_i32_1 = arith.constant 0 : i32
    return %arg0, %c0_i32, %c0_i32_0 : i32, i32, i32
  }
}

</mosaic_0001>

<llo_original>
// kernel: tpu_custom_call.1
$region0: #{tpu_custom_call.1}
  #allocation0 [shape = 'u32[]', space=smem, size = 0x4, offset = 0x4, fixed_abs, tag = 'smem constant byte address 0x4 - core index']
  #allocation1 [shape = 'u32[144,128]{1,0:T(1,128)}', space=vmem, size = 0x12000, scoped, tag = 'internal scratch']
  %s0 = inlined_call_operand.hbm [shape: f32[4,4,256], index: 0, kind: input, shape index: {}]
  %s1 = inlined_call_operand.vmem [shape: f32[4,8], index: 1, kind: input, shape index: {}]
  %s2 = inlined_call_operand.vmem [shape: f32[1,8], index: 2, kind: input, shape index: {}]
  %s3 = inlined_call_operand.vmem [shape: f32[8,4], index: 3, kind: input, shape index: {}]
  %s4 = inlined_call_operand.vmem [shape: f32[1,4], index: 4, kind: input, shape index: {}]
  %s5 = inlined_call_operand.hbm [shape: f32[4,4,256], index: 5, kind: output, shape index: {}]
  %s6 = sld [smem:[#allocation0]]
  $region57: #{tpu_custom_call.1} parent=0
    _
  %s8 = ssub.s32 1, %s6
  %s9 = scalar_select 0, %s8, %s6
  $region1: #{tpu_custom_call.1} parent=0
    #allocation2 [shape = 'u8[16384]{0}', space=vmem, size = 0x4000, scoped, tag = 'input window, operand 0']
    #allocation3 [shape = 's32[2]{0}', space=sflag, size = 0x8, scoped, tag = 'scoped memory for tpu_custom_call.1']
    #allocation4 [shape = 's32[2]{0}', space=sflag, size = 0x8, scoped, tag = 'scoped memory for tpu_custom_call.1']
    #allocation5 [shape = 'u8[16384]{0}', space=vmem, size = 0x4000, scoped, tag = 'output window, operand 0']
    %10 = vsyncpa [#allocation3], 0
    %s11 = scalar_lea.sflag [#allocation3], 1
    %12 = vsyncpa %s11, 0
    %13 = vsyncpa [#allocation4], 0
    %s14 = scalar_lea.sflag [#allocation4], 1
    %15 = vsyncpa %s14, 0
    loop: start=0, step=1, limit=4
    $region2: #{tpu_custom_call.1} parent=1 // loop_pre_header
      _
    $region3: #{tpu_custom_call.1} parent=1 // loop_header
      %s17 = sphi 0, %s21
      %p18 = scmp.ge.s32.totalorder %s17, 4
      %s27 = sphi 0, %s29
      %s30 = sphi 0, %s27
      %s31 = sphi 0, %s30
      %s47 = sphi 0, %s31
      %s51 = sphi 0, %s51
      %s53 = sphi 0, %s51
      %s54 = sphi 0, %s53
      %s68 = sphi 0, %s54
      %s72 = sphi 0, %s72
      %s74 = sphi 0, %s72
      %s75 = sphi 0, %s74
      %s89 = sphi 0, %s75
      %s93 = sphi 0, %s93
      %s95 = sphi 0, %s93
      %s96 = sphi 0, %s95
      %s110 = sphi 0, %s96
      %s114 = sphi 0, %s114
      %s116 = sphi 0, %s114
      %s117 = sphi 0, %s116
      %s131 = sphi 0, %s117
      %s137 = sphi 0, %s139
      %s140 = sphi 0, %s137
      %s141 = sphi 0, %s140
      %s157 = sphi 0, %s141
    $region4: #{tpu_custom_call.1} parent=1 // loop_header_branch
      %20 = sbr.rel (%p18) target = $region8
    $region5: #{tpu_custom_call.1} parent=1 // loop_body
      %s22 = ssub.s32 %s17, 1
      %s23 = ssub.s32 %s17, 2
      %s24 = sadd.s32 %s17, 1
      %s25 = ssub.s32 %s17, %s24
      %p26 = scmp.eq.s32.totalorder %s25, 0
      %s28 = sadd.s32 %s27, 1
      %s29 = scalar_select %p26, %s27, %s28
      %p32 = pneg %p26
      %p33 = scmp.eq.s32.totalorder %s17, 1
      %p34 = por %p32, %p33
      %p35 = scmp.ne.s32.totalorder %s27, %s30
      %p36 = scmp.eq.s32.totalorder %s17, 0
      %p37 = por %p35, %p36
      %p38 = scmp.ne.s32.totalorder %s27, %s30
      %p39 = scmp.eq.s32.totalorder %s22, 1
      %p40 = por %p38, %p39
      %p41 = scmp.ne.s32.totalorder %s30, %s31
      %p42 = scmp.eq.s32.totalorder %s22, 0
      %p43 = por %p41, %p42
      %p44 = scmp.ne.s32.totalorder %s30, %s31
      %p45 = scmp.eq.s32.totalorder %s23, 1
      %p46 = por %p44, %p45
      %p48 = scmp.ne.s32.totalorder %s31, %s47
      %p49 = scmp.eq.s32.totalorder %s23, 0
      %p50 = por %p48, %p49
      %s52 = sadd.s32 %s51, 1
      %p55 = scmp.eq.s32.totalorder %s17, 1
      %p56 = scmp.ne.s32.totalorder %s51, %s53
      %p57 = scmp.eq.s32.totalorder %s17, 0
      %p58 = por %p56, %p57
      %p59 = scmp.ne.s32.totalorder %s51, %s53
      %p60 = scmp.eq.s32.totalorder %s22, 1
      %p61 = por %p59, %p60
      %p62 = scmp.ne.s32.totalorder %s53, %s54
      %p63 = scmp.eq.s32.totalorder %s22, 0
      %p64 = por %p62, %p63
      %p65 = scmp.ne.s32.totalorder %s53, %s54
      %p66 = scmp.eq.s32.totalorder %s23, 1
      %p67 = por %p65, %p66
      %p69 = scmp.ne.s32.totalorder %s54, %s68
      %p70 = scmp.eq.s32.totalorder %s23, 0
      %p71 = por %p69, %p70
      %s73 = sadd.s32 %s72, 1
      %p76 = scmp.eq.s32.totalorder %s17, 1
      %p77 = scmp.ne.s32.totalorder %s72, %s74
      %p78 = scmp.eq.s32.totalorder %s17, 0
      %p79 = por %p77, %p78
      %p80 = scmp.ne.s32.totalorder %s72, %s74
      %p81 = scmp.eq.s32.totalorder %s22, 1
      %p82 = por %p80, %p81
      %p83 = scmp.ne.s32.totalorder %s74, %s75
      %p84 = scmp.eq.s32.totalorder %s22, 0
      %p85 = por %p83, %p84
      %p86 = scmp.ne.s32.totalorder %s74, %s75
      %p87 = scmp.eq.s32.totalorder %s23, 1
      %p88 = por %p86, %p87
      %p90 = scmp.ne.s32.totalorder %s75, %s89
      %p91 = scmp.eq.s32.totalorder %s23, 0
      %p92 = por %p90, %p91
      %s94 = sadd.s32 %s93, 1
      %p97 = scmp.eq.s32.totalorder %s17, 1
      %p98 = scmp.ne.s32.totalorder %s93, %s95
      %p99 = scmp.eq.s32.totalorder %s17, 0
      %p100 = por %p98, %p99
      %p101 = scmp.ne.s32.totalorder %s93, %s95
      %p102 = scmp.eq.s32.totalorder %s22, 1
      %p103 = por %p101, %p102
      %p104 = scmp.ne.s32.totalorder %s95, %s96
      %p105 = scmp.eq.s32.totalorder %s22, 0
      %p106 = por %p104, %p105
      %p107 = scmp.ne.s32.totalorder %s95, %s96
      %p108 = scmp.eq.s32.totalorder %s23, 1
      %p109 = por %p107, %p108
      %p111 = scmp.ne.s32.totalorder %s96, %s110
      %p112 = scmp.eq.s32.totalorder %s23, 0
      %p113 = por %p111, %p112
      %s115 = sadd.s32 %s114, 1
      %p118 = scmp.eq.s32.totalorder %s17, 1
      %p119 = scmp.ne.s32.totalorder %s114, %s116
      %p120 = scmp.eq.s32.totalorder %s17, 0
      %p121 = por %p119, %p120
      %p122 = scmp.ne.s32.totalorder %s114, %s116
      %p123 = scmp.eq.s32.totalorder %s22, 1
      %p124 = por %p122, %p123
      %p125 = scmp.ne.s32.totalorder %s116, %s117
      %p126 = scmp.eq.s32.totalorder %s22, 0
      %p127 = por %p125, %p126
      %p128 = scmp.ne.s32.totalorder %s116, %s117
      %p129 = scmp.eq.s32.totalorder %s23, 1
      %p130 = por %p128, %p129
      %p132 = scmp.ne.s32.totalorder %s117, %s131
      %p133 = scmp.eq.s32.totalorder %s23, 0
      %p134 = por %p132, %p133
      %s135 = ssub.s32 %s17, %s24
      %p136 = scmp.eq.s32.totalorder %s135, 0
      %s138 = sadd.s32 %s137, 1
      %s139 = scalar_select %p136, %s137, %s138
      %p142 = pneg %p136
      %p143 = scmp.eq.s32.totalorder %s17, 1
      %p144 = por %p142, %p143
      %p145 = scmp.ne.s32.totalorder %s137, %s140
      %p146 = scmp.eq.s32.totalorder %s17, 0
      %p147 = por %p145, %p146
      %p148 = scmp.ne.s32.totalorder %s137, %s140
      %p149 = scmp.eq.s32.totalorder %s22, 1
      %p150 = por %p148, %p149
      %p151 = scmp.ne.s32.totalorder %s140, %s141
      %p152 = scmp.eq.s32.totalorder %s22, 0
      %p153 = por %p151, %p152
      %p154 = scmp.ne.s32.totalorder %s140, %s141
      %p155 = scmp.eq.s32.totalorder %s23, 1
      %p156 = por %p154, %p155
      %p158 = scmp.ne.s32.totalorder %s141, %s157
      %p159 = scmp.eq.s32.totalorder %s23, 0
      %p160 = por %p158, %p159
      %p161 = scmp.le.s32.totalorder 1, %s17
      %p162 = scmp.lt.s32.totalorder %s17, 3
      %p163 = pnand %p161, %p162
      %p164 = pneg %p163
      // Predicated region
      $region9: #{tpu_custom_call.1} parent=5 // pred_check
        _
      $region10: #{tpu_custom_call.1} parent=5 // pred_check_branch
        %166 = sbr.rel (%p163) target = $region12
      $region11: #{tpu_custom_call.1} parent=5 // pred_region
        %s167 = ssub.s32 %s17, 1
        // Predicated region
        $region13: #{tpu_custom_call.1} parent=11 // pred_check
          %p168 = pneg %p64
        $region14: #{tpu_custom_call.1} parent=11 // pred_check_branch
          %170 = sbr.rel (%p168) target = $region16
        $region15: #{tpu_custom_call.1} parent=11 // pred_region
          _
        $region16: #{tpu_custom_call.1} parent=11 // pred_fallthru
          _
        // Predicated region
        $region17: #{tpu_custom_call.1} parent=11 // pred_check
          %p171 = pneg %p85
        $region18: #{tpu_custom_call.1} parent=11 // pred_check_branch
          %173 = sbr.rel (%p171) target = $region20
        $region19: #{tpu_custom_call.1} parent=11 // pred_region
          _
        $region20: #{tpu_custom_call.1} parent=11 // pred_fallthru
          _
        // Predicated region
        $region21: #{tpu_custom_call.1} parent=11 // pred_check
          %p174 = pneg %p106
        $region22: #{tpu_custom_call.1} parent=11 // pred_check_branch
          %176 = sbr.rel (%p174) target = $region24
        $region23: #{tpu_custom_call.1} parent=11 // pred_region
          _
        $region24: #{tpu_custom_call.1} parent=11 // pred_fallthru
          _
        // Predicated region
        $region25: #{tpu_custom_call.1} parent=11 // pred_check
          %p177 = pneg %p127
        $region26: #{tpu_custom_call.1} parent=11 // pred_check_branch
          %179 = sbr.rel (%p177) target = $region28
        $region27: #{tpu_custom_call.1} parent=11 // pred_region
          _
        $region28: #{tpu_custom_call.1} parent=11 // pred_fallthru
          _
      $region12: #{tpu_custom_call.1} parent=5 // pred_fallthru
        _
      %p180 = scmp.lt.s32.totalorder %s17, 2
      // Predicated region
      $region29: #{tpu_custom_call.1} parent=5 // pred_check
        %p181 = pneg %p180
      $region30: #{tpu_custom_call.1} parent=5 // pred_check_branch
        %183 = sbr.rel (%p181) target = $region32
      $region31: #{tpu_custom_call.1} parent=5 // pred_region
        // Predicated region
        $region33: #{tpu_custom_call.1} parent=31 // pred_check
          %p184 = pneg %p37
        $region34: #{tpu_custom_call.1} parent=31 // pred_check_branch
          %186 = sbr.rel (%p184) target = $region36
        $region35: #{tpu_custom_call.1} parent=31 // pred_region
          %s187 = sand.u32 %s27, 1
          %s188 = scalar_lea.sflag [#allocation3], %s187
          %s189 = sand.u32 %s27, 1
          %s190 = smul.addr %s189, 16
          %s191 = scalar_lea.vmem [#allocation2], %s190
          %s192 = smul.u32 2, %s17
          %s194 = ssub.s32 256, 256
          %195 = vsyncadd %s188, %s194
          %s196 = smul.addr %s192, 2
          %s197 = smul.addr %s196, 64
          %s198 = scalar_lea.hbm %s0, %s197
          %s199 = sshll.u32 %s191, 4
          %s200 = int_to_ptr.vmem [resolvable:$true] %s199
          %205 = dma.hbm_to_vmem [thread:$0]  %s198, 256, %s200, %s188, 128, 128, 8
        $region36: #{tpu_custom_call.1} parent=31 // pred_fallthru
          _
      $region32: #{tpu_custom_call.1} parent=5 // pred_fallthru
        _
      %p206 = scmp.le.s32.totalorder 1, %s17
      %p207 = scmp.lt.s32.totalorder %s17, 3
      %p208 = pnand %p206, %p207
      %p209 = pneg %p208
      // Predicated region
      $region37: #{tpu_custom_call.1} parent=5 // pred_check
        _
      $region38: #{tpu_custom_call.1} parent=5 // pred_check_branch
        %211 = sbr.rel (%p208) target = $region40
      $region39: #{tpu_custom_call.1} parent=5 // pred_region
        %s212 = ssub.s32 %s17, 1
        %s213 = sand.u32 %s30, 1
        %s214 = scalar_lea.sflag [#allocation3], %s213
        %s215 = sand.u32 %s30, 1
        %s216 = smul.addr %s215, 16
        %s217 = scalar_lea.vmem [#allocation2], %s216
        // Predicated region
        $region41: #{tpu_custom_call.1} parent=39 // pred_check
          %p218 = pneg %p43
        $region42: #{tpu_custom_call.1} parent=39 // pred_check_branch
          %220 = sbr.rel (%p218) target = $region44
        $region43: #{tpu_custom_call.1} parent=39 // pred_region
          %221 = dma.done %s214, 256
        $region44: #{tpu_custom_call.1} parent=39 // pred_fallthru
          _
        %s222 = sand.u32 %s30, 1
        %s223 = scalar_lea.sflag [#allocation3], %s222
        %s224 = sand.u32 %s30, 1
        %s225 = smul.addr %s224, 16
        %s226 = scalar_lea.vmem [#allocation2], %s225
        %p227 = pneg %p43
        %p228 = pneg %p40
        %p229 = pneg %p64
        %p230 = pneg %p61
        %p231 = pneg %p85
        %p232 = pneg %p82
        %p233 = pneg %p106
        %p234 = pneg %p103
        %p235 = pneg %p127
        %p236 = pneg %p124
        %p237 = pneg %p153
        %p238 = pneg %p150
        %s239 = sand.u32 %s140, 1
        %s240 = scalar_lea.sflag [#allocation4], %s239
        %s241 = sand.u32 %s140, 1
        %s242 = smul.addr %s241, 16
        %s243 = scalar_lea.vmem [#allocation5], %s242
        %s244 = smul.u32 2, %s22
        %s245 = smul.u32 2, %s22
        %v246 = vld [vmem:[%s217] sm:$0xf]
        %v247 = vld [vmem:[%s217 + $0x8] sm:$0xf]
        %v248 = vld [vmem:[%s217 + $0x4] sm:$0xf]
        %v249 = vld [vmem:[%s217 + $0xc] sm:$0xf]
        %v250 = vadd.f32 %v246, %v248
        %v251 = vadd.f32 %v247, %v249
        %vm252 = vcmask 1043456
        %v253 = vsel %vm252, %v250, 0.0
        %254 = vadd.xlane.f32.xlu0 %v253
        %v255 = vpop.xlane.xlu0 %254
        %v256 = vsel %vm252, %v251, 0.0
        %257 = vadd.xlane.f32.xlu0 %v256
        %v258 = vpop.xlane.xlu0 %257
        %v259 = vmul.f32 %v255, 0.00390625
        %v260 = vmul.f32 %v258, 0.00390625
        %v261 = vld [vmem:[%s1] sm:$0xf]
        %v262 = vld [vmem:[%s2] sm:$0x1]
        %v264 = vlaneseq
        %v265 = vshrl.u32 %v264, 7
        %v266 = vsub.s32 0, %v265
        %v267 = vrot.slane %v262, %v266
        %v271 = vlaneseq
        %v272 = vand.u32 %v271, 127
        %v273 = vlaneseq
        %v274 = vshrl.u32 %v273, 7
        %v275 = vsub.s32 %v272, %v274
        %v276 = vrot.slane %v259, %v275
        %v277 = vlaneseq
        %v278 = vshrl.u32 %v277, 7
        %v279 = vsub.s32 %v272, %v278
        %v280 = vrot.slane %v260, %v279
        %vm281 = vcmask 1041409
        %v282 = vsel %vm281, %v280, %v276
        %vm283 = vcmask 31744
        %v284 = vsel %vm283, %v282, 0
        %v287 = vsel %vm252, %v261, 0
        %289 = vmatprep.subr.mxu0 0.0
        %290 = vmatpush1.msra.mxu0 %v287
        %291 = vmatprep.subr.mxu0 0.0
        %292 = vmatpush1.msra.mxu0 0.0
        %293 = vmatprep.subr.mxu0 0.0
        %294 = vmatpush1.msra.mxu0 0.0
        %295 = vmatprep.subr.mxu0 0.0
        %296 = vmatpush1.msra.mxu0 0.0
        %297 = vmatprep.subr.mxu0 0.0
        %298 = vmatpush1.msra.mxu0 0.0
        %299 = vmatprep.subr.mxu0 0.0
        %300 = vmatpush1.msra.mxu0 0.0
        %301 = vmatprep.subr.mxu0 0.0
        %302 = vmatpush1.msra.mxu0 0.0
        %303 = vmatprep.subr.mxu0 0.0
        %304 = vmatpush1.msra.mxu0 0.0
        %305 = vmatprep.subr.mxu0 0.0
        %306 = vmatpush1.msra.mxu0 0.0
        %307 = vmatprep.subr.mxu0 0.0
        %308 = vmatpush1.msra.mxu0 0.0
        %309 = vmatprep.subr.mxu0 0.0
        %310 = vmatpush1.msra.mxu0 0.0
        %311 = vmatprep.subr.mxu0 0.0
        %312 = vmatpush1.msra.mxu0 0.0
        %313 = vmatprep.subr.mxu0 0.0
        %314 = vmatpush1.msra.mxu0 0.0
        %315 = vmatprep.subr.mxu0 0.0
        %316 = vmatpush1.msra.mxu0 0.0
        %317 = vmatprep.subr.mxu0 0.0
        %318 = vmatpush1.msra.mxu0 0.0
        %319 = vmatprep.subr.mxu0 0.0
        %320 = vmatpush1.msra.mxu0 0.0
        %321 = vmatprep.subr.mxu0 0.0
        %322 = vmatpush1.msra.mxu0 0.0
        %323 = vmatprep.subr.mxu0 0.0
        %324 = vmatpush1.msra.mxu0 0.0
        %325 = vmatprep.subr.mxu0 0.0
        %326 = vmatpush1.msra.mxu0 0.0
        %327 = vmatprep.subr.mxu0 0.0
        %328 = vmatpush1.msra.mxu0 0.0
        %329 = vmatprep.subr.mxu0 0.0
        %330 = vmatpush1.msra.mxu0 0.0
        %331 = vmatprep.subr.mxu0 0.0
        %332 = vmatpush1.msra.mxu0 0.0
        %333 = vmatprep.subr.mxu0 0.0
        %334 = vmatpush1.msra.mxu0 0.0
        %335 = vmatprep.subr.mxu0 0.0
        %336 = vmatpush1.msra.mxu0 0.0
        %337 = vmatprep.subr.mxu0 0.0
        %338 = vmatpush1.msra.mxu0 0.0
        %339 = vmatprep.subr.mxu0 0.0
        %340 = vmatpush1.msra.mxu0 0.0
        %341 = vmatprep.subr.mxu0 0.0
        %342 = vmatpush1.msra.mxu0 0.0
        %343 = vmatprep.subr.mxu0 0.0
        %344 = vmatpush1.msra.mxu0 0.0
        %345 = vmatprep.subr.mxu0 0.0
        %346 = vmatpush1.msra.mxu0 0.0
        %347 = vmatprep.subr.mxu0 0.0
        %348 = vmatpush1.msra.mxu0 0.0
        %349 = vmatprep.subr.mxu0 0.0
        %350 = vmatpush1.msra.mxu0 0.0
        %351 = vmatprep.subr.mxu0 0.0
        %352 = vmatpush1.msra.mxu0 0.0
        %353 = vmatprep.mubr.f32.mxu0 0.0
        %354 = vmatmul.mubr.f32.gmra.mrb[0].mxu0 %v284
        %v355 = vpop.f32.mrb[0].mxu0
        %v356 = vadd.f32 %v267, %v355
        %v357 = vpop.f32.mrb[0].mxu0
        %358 = vdwg.mxu0
        %v359 = vmax.f32 %v356, 0.0
        %v360 = vld [vmem:[%s3] sm:$0xff]
        %v361 = vld [vmem:[%s4] sm:$0x1]
        %v363 = vlaneseq
        %v364 = vshrl.u32 %v363, 7
        %v365 = vsub.s32 0, %v364
        %v366 = vrot.slane %v361, %v365
        %vm368 = vcmask 64512
        %v370 = vsel %vm368, %v359, 0
        %372 = vmatprep.subr.mxu0 0.0
        %373 = vmatpush1.msra.mxu0 %v360
        %374 = vmatprep.subr.mxu0 0.0
        %375 = vmatpush1.msra.mxu0 0.0
        %376 = vmatprep.subr.mxu0 0.0
        %377 = vmatpush1.msra.mxu0 0.0
        %378 = vmatprep.subr.mxu0 0.0
        %379 = vmatpush1.msra.mxu0 0.0
        %380 = vmatprep.subr.mxu0 0.0
        %381 = vmatpush1.msra.mxu0 0.0
        %382 = vmatprep.subr.mxu0 0.0
        %383 = vmatpush1.msra.mxu0 0.0
        %384 = vmatprep.subr.mxu0 0.0
        %385 = vmatpush1.msra.mxu0 0.0
        %386 = vmatprep.subr.mxu0 0.0
        %387 = vmatpush1.msra.mxu0 0.0
        %388 = vmatprep.subr.mxu0 0.0
        %389 = vmatpush1.msra.mxu0 0.0
        %390 = vmatprep.subr.mxu0 0.0
        %391 = vmatpush1.msra.mxu0 0.0
        %392 = vmatprep.subr.mxu0 0.0
        %393 = vmatpush1.msra.mxu0 0.0
        %394 = vmatprep.subr.mxu0 0.0
        %395 = vmatpush1.msra.mxu0 0.0
        %396 = vmatprep.subr.mxu0 0.0
        %397 = vmatpush1.msra.mxu0 0.0
        %398 = vmatprep.subr.mxu0 0.0
        %399 = vmatpush1.msra.mxu0 0.0
        %400 = vmatprep.subr.mxu0 0.0
        %401 = vmatpush1.msra.mxu0 0.0
        %402 = vmatprep.subr.mxu0 0.0
        %403 = vmatpush1.msra.mxu0 0.0
        %404 = vmatprep.subr.mxu0 0.0
        %405 = vmatpush1.msra.mxu0 0.0
        %406 = vmatprep.subr.mxu0 0.0
        %407 = vmatpush1.msra.mxu0 0.0
        %408 = vmatprep.subr.mxu0 0.0
        %409 = vmatpush1.msra.mxu0 0.0
        %410 = vmatprep.subr.mxu0 0.0
        %411 = vmatpush1.msra.mxu0 0.0
        %412 = vmatprep.subr.mxu0 0.0
        %413 = vmatpush1.msra.mxu0 0.0
        %414 = vmatprep.subr.mxu0 0.0
        %415 = vmatpush1.msra.mxu0 0.0
        %416 = vmatprep.subr.mxu0 0.0
        %417 = vmatpush1.msra.mxu0 0.0
        %418 = vmatprep.subr.mxu0 0.0
        %419 = vmatpush1.msra.mxu0 0.0
        %420 = vmatprep.subr.mxu0 0.0
        %421 = vmatpush1.msra.mxu0 0.0
        %422 = vmatprep.subr.mxu0 0.0
        %423 = vmatpush1.msra.mxu0 0.0
        %424 = vmatprep.subr.mxu0 0.0
        %425 = vmatpush1.msra.mxu0 0.0
        %426 = vmatprep.subr.mxu0 0.0
        %427 = vmatpush1.msra.mxu0 0.0
        %428 = vmatprep.subr.mxu0 0.0
        %429 = vmatpush1.msra.mxu0 0.0
        %430 = vmatprep.subr.mxu0 0.0
        %431 = vmatpush1.msra.mxu0 0.0
        %432 = vmatprep.subr.mxu0 0.0
        %433 = vmatpush1.msra.mxu0 0.0
        %434 = vmatprep.subr.mxu0 0.0
        %435 = vmatpush1.msra.mxu0 0.0
        %436 = vmatprep.mubr.f32.mxu0 0.0
        %437 = vmatmul.mubr.f32.gmra.mrb[0].mxu0 %v370
        %v438 = vpop.f32.mrb[0].mxu0
        %v439 = vadd.f32 %v366, %v438
        %v440 = vpop.f32.mrb[0].mxu0
        %441 = vdwg.mxu0
        %v442 = vxor.u32 %v439, 2147483648
        %v443 = vmul.f32 %v442, 1.442695
        %v444 = vpow.pop %v443
        %v445 = vadd.f32 %v444, 1.0
        %v446 = vrcp.pop %v445
        %v447 = vmul.f32 1.0, %v446
        %v448 = vld [vmem:[%s217] sm:$0xff]
        %v449 = vld [vmem:[%s217 + $0x8] sm:$0xff]
        %v450 = vlaneseq
        %v451 = vshrl.u32 %v450, 7
        %v452 = vsub.s32 0, %v451
        %v453 = vrot.slane %v447, %v452
        %455 = vbcast.lane.b32.xlu0 %v453, 256
        %v456 = vpop.permute.xlu0 %455
        %v457 = vlaneseq
        %v458 = vshrl.u32 %v457, 7
        %v459 = vsub.s32 1, %v458
        %v460 = vrot.slane %v447, %v459
        %462 = vbcast.lane.b32.xlu0 %v460, 256
        %v463 = vpop.permute.xlu0 %462
        %v467 = vunpack.c.l.s4 839922192
        %v468 = vunpack.c.0.s8 %v467
        %v469 = vlaneseq
        %v470 = vshrl.u32 %v469, 7
        %v471 = vsub.s32 %v468, %v470
        %v472 = vrot.slane %v456, %v471
        %v474 = vunpack.c.l.s4 839922192
        %v475 = vunpack.c.0.s8 %v474
        %v476 = vlaneseq
        %v477 = vshrl.u32 %v476, 7
        %v478 = vsub.s32 %v475, %v477
        %v479 = vrot.slane %v463, %v478
        %v482 = vmul.f32 %v448, %v472
        %v483 = vmul.f32 %v449, %v479
        %484 = vst [vmem:[%s243] sm:$0xff] %v482
        %485 = vst [vmem:[%s243 + $0x8] sm:$0xff] %v483
        %s486 = sand.u32 %s140, 1
        %s487 = scalar_lea.sflag [#allocation4], %s486
        %s488 = sand.u32 %s140, 1
        %s489 = smul.addr %s488, 16
        %s490 = scalar_lea.vmem [#allocation5], %s489
        // Predicated region
        $region45: #{tpu_custom_call.1} parent=39 // pred_check
          %p491 = pneg %p150
        $region46: #{tpu_custom_call.1} parent=39 // pred_check_branch
          %493 = sbr.rel (%p491) target = $region48
        $region47: #{tpu_custom_call.1} parent=39 // pred_region
          %s494 = smul.u32 2, %s22
          %s496 = ssub.s32 256, 256
          %497 = vsyncadd %s487, %s496
          %s498 = smul.addr %s494, 2
          %s499 = smul.addr %s498, 64
          %s500 = scalar_lea.hbm %s5, %s499
          %s501 = sshll.u32 %s490, 4
          %s502 = int_to_ptr.vmem [resolvable:$true] %s501
          %507 = dma.vmem_to_hbm [thread:$0]  %s502, 256, %s500, %s487, 128, 128, 8
        $region48: #{tpu_custom_call.1} parent=39 // pred_fallthru
          _
      $region40: #{tpu_custom_call.1} parent=5 // pred_fallthru
        _
      %p508 = scmp.le.s32.totalorder 2, %s17
      // Predicated region
      $region49: #{tpu_custom_call.1} parent=5 // pred_check
        %p509 = pneg %p508
      $region50: #{tpu_custom_call.1} parent=5 // pred_check_branch
        %511 = sbr.rel (%p509) target = $region52
      $region51: #{tpu_custom_call.1} parent=5 // pred_region
        %s512 = ssub.s32 %s17, 2
        // Predicated region
        $region53: #{tpu_custom_call.1} parent=51 // pred_check
          %p513 = pneg %p156
        $region54: #{tpu_custom_call.1} parent=51 // pred_check_branch
          %515 = sbr.rel (%p513) target = $region56
        $region55: #{tpu_custom_call.1} parent=51 // pred_region
          %s516 = sand.u32 %s141, 1
          %s517 = scalar_lea.sflag [#allocation4], %s516
          %s518 = sand.u32 %s141, 1
          %s519 = smul.addr %s518, 16
          %s520 = scalar_lea.vmem [#allocation5], %s519
          %521 = dma.done %s517, 256
        $region56: #{tpu_custom_call.1} parent=51 // pred_fallthru
          _
      $region52: #{tpu_custom_call.1} parent=5 // pred_fallthru
        _
    $region6: #{tpu_custom_call.1} parent=1 // loop_footer
      %s21 = sadd.s32 1, %s17
    $region7: #{tpu_custom_call.1} parent=1 // loop_footer_branch
      %16 = sbr.rel target = $region3
    $region8: #{tpu_custom_call.1} parent=1 // loop_exit
      _
    %522 = vsyncpa [#allocation3], 1
    %s523 = scalar_lea.sflag [#allocation3], 1
    %524 = vsyncpa %s523, 1
    %525 = vsyncpa [#allocation4], 1
    %s526 = scalar_lea.sflag [#allocation4], 1
    %527 = vsyncpa %s526, 1

</llo_original>
